<compile_context>
chip_gen: v7x
topology: tpu7x:2x2x1
jax: 0.10.0
libtpu: 0.0.40
codegen_flags: <defaults>
</compile_context>

<pallas_src>
import jax
import jax.numpy as jnp
from jax import lax
from jax.experimental import pallas as pl
from jax.experimental.pallas import tpu as pltpu


# --------------------------------------------------------------------------
# Fused 3x3 conv + BN(eval) + ReLU kernel: one (batch, row-tile) per grid step
# --------------------------------------------------------------------------
def _conv3x3_bn_relu_kernel(xmid_ref, xhalo_ref, w_ref, scale_ref, shift_ref,
                            o_ref, slab_ref):
    """
    xmid_ref:  (1, TH,   W+2, Cin)   bf16  body rows of the halo-padded input tile
    xhalo_ref: (1, 2,    W+2, Cin)   bf16  2-row bottom halo of this tile
    w_ref:     (9*Cin, Cout_pad)     bf16  conv weights, (dy, dx, ci) major order
    scale_ref: (1, Cout_pad)         f32   BN scale  (gamma / sqrt(var+eps))
    shift_ref: (1, Cout_pad)         f32   BN shift  (beta - mean*scale)
    o_ref:     (1, TH, W, Cout_pad)  bf16  lane-dense output tile
    slab_ref:  (TH, W, 9*Cin)        bf16  VMEM scratch: im2col slab
    """
    th, w, cout = o_ref.shape[1], o_ref.shape[2], o_ref.shape[3]
    cin = xmid_ref.shape[3]

    # Stitch the (TH+2, W+2, Cin) halo window; major-axis concat => no lane/sublane work.
    x_win = jnp.concatenate([xmid_ref[0], xhalo_ref[0]], axis=0)

    # Build the im2col slab once:
    #   dx-shifts: 3 sublane slices (only dx=1,2 need a relayout),
    #   dy-shifts: free major-axis slices,
    #   each of the 9 taps lands in its own lane range of the slab scratch.
    for dx in range(3):
        col = x_win[:, dx:dx + w, :]                       # (TH+2, W, Cin)
        for dy in range(3):
            k = dy * 3 + dx                                # matches weight layout
            slab_ref[:, :, k * cin:(k + 1) * cin] = col[dy:dy + th]

    # Single MXU contraction: M = TH*W, K = 9*Cin, N = Cout_pad, f32 accumulate.
    slab = slab_ref[...].reshape(th * w, 9 * cin)
    acc = jnp.dot(slab, w_ref[...], preferred_element_type=jnp.float32)

    # f32 epilogue: BN affine (scale kept out of the bf16 weights) + ReLU, one bf16 cast.
    y = jnp.maximum(acc * scale_ref[...] + shift_ref[...], 0.0)
    o_ref[...] = y.reshape(1, th, w, cout).astype(o_ref.dtype)


# --------------------------------------------------------------------------
# Helpers
# --------------------------------------------------------------------------
def _round_up(x, m):
    return (x + m - 1) // m * m


def _choose_row_tile(h):
    """Largest even divisor of H (<=32) giving >=2 row tiles; fallback: whole image."""
    for th in range(min(h, 32), 1, -1):
        if h % th == 0 and th % 2 == 0 and h // th >= 2:
            return th
    return h


# --------------------------------------------------------------------------
# Canonical NHWC entry point (TPU-native inter-layer layout)
# --------------------------------------------------------------------------
def double_conv2_forward_nhwc(x, params, eps=1e-5):
    """x: (N, H, W, Cin) float, NHWC.  Returns (N, H, W, Cout) bfloat16."""
    n, h, w, cin = x.shape
    wt = params["w"]                                   # (Cout, Cin, 3, 3) torch OIHW
    cout = wt.shape[0]
    cout_pad = _round_up(cout, 128)                    # lane-dense output stores
    assert h % 2 == 0, "odd H not supported"           # TODO(synk): odd-H halo blocks

    th = _choose_row_tile(h)
    n_row_tiles = h // th

    # Eval-mode BatchNorm affine, kept in f32 for the kernel epilogue.
    scale = (params["gamma"] / jnp.sqrt(params["var"] + eps)).astype(jnp.float32)
    shift = (params["beta"] - params["mean"] * scale).astype(jnp.float32)
    scale_p = jnp.pad(scale, (0, cout_pad - cout)).reshape(1, cout_pad)
    shift_p = jnp.pad(shift, (0, cout_pad - cout)).reshape(1, cout_pad)

    # OIHW -> (dy, dx, Cin, Cout) -> (9*Cin, Cout_pad); bf16 MXU operand, NO scale folded.
    wmat = jnp.transpose(wt, (2, 3, 1, 0)).reshape(9 * cin, cout)
    wmat = jnp.pad(wmat, ((0, 0), (0, cout_pad - cout))).astype(jnp.bfloat16)

    # bf16 cast + 1-px halo pad (one fused XLA pass over the small bf16 input).
    xp = jnp.pad(x.astype(jnp.bfloat16), ((0, 0), (1, 1), (1, 1), (0, 0)))

    flops = 2 * n * h * w * 9 * cin * cout_pad
    bytes_accessed = (xp.size * 2 + wmat.size * 2 + n * h * w * cout_pad * 2
                      + 2 * cout_pad * 4)

    # VMEM budget: double-buffered row blocks + resident weights + slab scratch.
    blk_bytes = (2 * (th + 2) * (w + 2) * cin * 2              # input row blocks
                 + 2 * th * w * cout_pad * 2                   # output row blocks
                 + 2 * (9 * cin * cout_pad * 2 + 2 * cout_pad * 4)  # weights/scale/shift
                 + th * w * 9 * cin * 2)                       # im2col slab scratch
    vmem_limit = int(min(60 << 20, max(32 << 20, 2 * blk_bytes)))

    out = pl.pallas_call(
        _conv3x3_bn_relu_kernel,
        out_shape=jax.ShapeDtypeStruct((n, h, w, cout_pad), jnp.bfloat16),
        grid_spec=pltpu.PrefetchScalarGridSpec(
            num_scalar_prefetch=0,
            grid=(n, n_row_tiles),
            in_specs=[
                # TH body rows of the halo-padded image (block index == row tile).
                pl.BlockSpec((1, th, w + 2, cin), lambda b, r: (b, r, 0, 0)),
                # 2-row bottom halo: block size 2 => element rows [(r+1)*TH, (r+1)*TH+2).
                pl.BlockSpec((1, 2, w + 2, cin),
                             lambda b, r: (b, (r + 1) * (th // 2), 0, 0)),
                # Grid-invariant operands stay VMEM-resident across all grid steps.
                pl.BlockSpec((9 * cin, cout_pad), lambda b, r: (0, 0)),
                pl.BlockSpec((1, cout_pad), lambda b, r: (0, 0)),
                pl.BlockSpec((1, cout_pad), lambda b, r: (0, 0)),
            ],
            out_specs=pl.BlockSpec((1, th, w, cout_pad), lambda b, r: (b, r, 0, 0)),
            scratch_shapes=[pltpu.VMEM((th, w, 9 * cin), jnp.bfloat16)],
        ),
        compiler_params=pltpu.CompilerParams(
            dimension_semantics=("parallel", "parallel"),
            vmem_limit_bytes=vmem_limit),
        cost_estimate=pl.CostEstimate(flops=flops, transcendentals=0,
                                      bytes_accessed=bytes_accessed),
    )(xp, xp, wmat, scale_p, shift_p)

    if cout_pad != cout:
        out = out[..., :cout]                          # drop lane padding
    return out


# --------------------------------------------------------------------------
# PyTorch-layout (NCHW) compatibility wrapper
# --------------------------------------------------------------------------
def double_conv2_forward(x_nchw, params, eps=1e-5):
    """x: (N, Cin, H, W).  Returns (N, Cout, H, W) bf16 (layout plumbing only here)."""
    y = double_conv2_forward_nhwc(jnp.transpose(x_nchw, (0, 2, 3, 1)), params, eps)
    return jnp.transpose(y, (0, 3, 1, 2))


# --------------------------------------------------------------------------
# Pure-JAX references (f32)
# --------------------------------------------------------------------------
def reference_forward_nhwc(x, params, eps=1e-5):
    w_hwio = jnp.transpose(params["w"], (2, 3, 1, 0))
    y = lax.conv_general_dilated(
        x, w_hwio, window_strides=(1, 1), padding=((1, 1), (1, 1)),
        dimension_numbers=("NHWC", "HWIO", "NHWC"))
    scale = params["gamma"] / jnp.sqrt(params["var"] + eps)
    shift = params["beta"] - params["mean"] * scale
    return jnp.maximum(y * scale + shift, 0.0)


def init_params(key, cin, cout):
    k = iter(jax.random.split(key, 8))
    nrm = lambda shape, s: jax.random.normal(next(k), shape, jnp.float32) * s
    return {
        "w": nrm((cout, cin, 3, 3), 0.05),              # Conv2d, bias=False
        "gamma": 1.0 + 0.1 * nrm((cout,), 1.0),         # BatchNorm2d (eval)
        "beta": 0.1 * nrm((cout,), 1.0),
        "mean": 0.1 * nrm((cout,), 1.0),
        "var": 1.0 + 0.1 * jnp.abs(nrm((cout,), 1.0)),
    }


if __name__ == "__main__":
    key = jax.random.PRNGKey(0)
    kx, kp = jax.random.split(key)

    N, CIN, COUT, H, W = 2, 32, 64, 16, 16
    x_nhwc = jax.random.normal(kx, (N, H, W, CIN), jnp.float32)
    params = init_params(kp, CIN, COUT)

    # Primary (NHWC, TPU-native) path.
    fwd = jax.jit(double_conv2_forward_nhwc)
    out = jax.block_until_ready(fwd(x_nhwc, params))
    assert out.shape == (N, H, W, COUT), out.shape
    assert out.dtype == jnp.bfloat16, out.dtype
    assert bool(jnp.all(jnp.isfinite(out.astype(jnp.float32))))

    ref = jax.block_until_ready(jax.jit(reference_forward_nhwc)(x_nhwc, params))
    err = float(jnp.max(jnp.abs(out.astype(jnp.float32) - ref)))
    assert err < 5e-2, f"max abs err vs reference (NHWC): {err}"

    # PyTorch-layout (NCHW) compatibility path.
    x_nchw = jnp.transpose(x_nhwc, (0, 3, 1, 2))
    out_nchw = jax.block_until_ready(jax.jit(double_conv2_forward)(x_nchw, params))
    ref_nchw = jnp.transpose(ref, (0, 3, 1, 2))
    err2 = float(jnp.max(jnp.abs(out_nchw.astype(jnp.float32) - ref_nchw)))
    assert err2 < 5e-2, f"max abs err vs reference (NCHW wrapper): {err2}"

    print("KERNEL_OK")
</pallas_src>

<mosaic_0001>
module attributes {stable_mosaic.version = 11 : i64} {
  func.func @_conv3x3_bn_relu_kernel(%arg0: i32, %arg1: i32, %arg2: memref<1x8x18x32xbf16, #tpu.memory_space<vmem>>, %arg3: memref<1x2x18x32xbf16, #tpu.memory_space<vmem>>, %arg4: memref<288x128xbf16, #tpu.memory_space<vmem>>, %arg5: memref<1x128xf32, #tpu.memory_space<vmem>>, %arg6: memref<1x128xf32, #tpu.memory_space<vmem>>, %arg7: memref<1x8x16x128xbf16, #tpu.memory_space<vmem>>, %arg8: memref<8x16x288xbf16, #tpu.memory_space<vmem>>) attributes {dimension_semantics = [#tpu.dimension_semantics<parallel>, #tpu.dimension_semantics<parallel>], iteration_bounds = array<i64: 2, 2>, scalar_prefetch = 0 : i64, scratch_operands = 1 : i64, tpu.core_type = #tpu.core_type<tc>, window_params = [{transform_indices = @transform_0, window_bounds = array<i64: 1, 8, 18, 32>}, {transform_indices = @transform_1, window_bounds = array<i64: 1, 2, 18, 32>}, {pipeline_mode = #tpu.pipeline_mode<synchronous>, transform_indices = @transform_2, window_bounds = array<i64: 288, 128>}, {pipeline_mode = #tpu.pipeline_mode<synchronous>, transform_indices = @transform_3, window_bounds = array<i64: 1, 128>}, {pipeline_mode = #tpu.pipeline_mode<synchronous>, transform_indices = @transform_4, window_bounds = array<i64: 1, 128>}, {transform_indices = @transform_5, window_bounds = array<i64: 1, 8, 16, 128>}]} {
    %c0 = arith.constant 0 : index
    %c0_0 = arith.constant 0 : index
    %c0_1 = arith.constant 0 : index
    %c0_2 = arith.constant 0 : index
    %0 = vector.load %arg2[%c0, %c0_0, %c0_1, %c0_2] : memref<1x8x18x32xbf16, #tpu.memory_space<vmem>>, vector<1x8x18x32xbf16>
    %1 = vector.shape_cast %0 : vector<1x8x18x32xbf16> to vector<8x18x32xbf16>
    %c0_3 = arith.constant 0 : index
    %c0_4 = arith.constant 0 : index
    %c0_5 = arith.constant 0 : index
    %c0_6 = arith.constant 0 : index
    %2 = vector.load %arg3[%c0_3, %c0_4, %c0_5, %c0_6] : memref<1x2x18x32xbf16, #tpu.memory_space<vmem>>, vector<1x2x18x32xbf16>
    %3 = vector.shape_cast %2 : vector<1x2x18x32xbf16> to vector<2x18x32xbf16>
    %4 = tpu.concatenate %1, %3 in 0 : vector<8x18x32xbf16>, vector<2x18x32xbf16> -> vector<10x18x32xbf16>
    %5 = vector.extract_strided_slice %4 {offsets = [0, 0, 0], sizes = [10, 16, 32], strides = [1, 1, 1]} : vector<10x18x32xbf16> to vector<10x16x32xbf16>
    %6 = vector.extract_strided_slice %5 {offsets = [0, 0, 0], sizes = [8, 16, 32], strides = [1, 1, 1]} : vector<10x16x32xbf16> to vector<8x16x32xbf16>
    %c0_7 = arith.constant 0 : index
    %c0_8 = arith.constant 0 : index
    %c0_9 = arith.constant 0 : index
    %7 = vector.load %arg8[%c0_7, %c0_8, %c0_9] : memref<8x16x288xbf16, #tpu.memory_space<vmem>>, vector<8x16x32xbf16>
    tpu.vector_store %arg8[%c0_7, %c0_8, %c0_9], %6 {strides = array<i32>} : memref<8x16x288xbf16, #tpu.memory_space<vmem>>, vector<8x16x32xbf16>,
    %8 = vector.extract_strided_slice %5 {offsets = [1, 0, 0], sizes = [8, 16, 32], strides = [1, 1, 1]} : vector<10x16x32xbf16> to vector<8x16x32xbf16>
    %c0_10 = arith.constant 0 : index
    %c0_11 = arith.constant 0 : index
    %c96 = arith.constant 96 : index
    %9 = vector.load %arg8[%c0_10, %c0_11, %c96] : memref<8x16x288xbf16, #tpu.memory_space<vmem>>, vector<8x16x32xbf16>
    tpu.vector_store %arg8[%c0_10, %c0_11, %c96], %8 {strides = array<i32>} : memref<8x16x288xbf16, #tpu.memory_space<vmem>>, vector<8x16x32xbf16>,
    %10 = vector.extract_strided_slice %5 {offsets = [2, 0, 0], sizes = [8, 16, 32], strides = [1, 1, 1]} : vector<10x16x32xbf16> to vector<8x16x32xbf16>
    %c0_12 = arith.constant 0 : index
    %c0_13 = arith.constant 0 : index
    %c192 = arith.constant 192 : index
    %11 = vector.load %arg8[%c0_12, %c0_13, %c192] : memref<8x16x288xbf16, #tpu.memory_space<vmem>>, vector<8x16x32xbf16>
    tpu.vector_store %arg8[%c0_12, %c0_13, %c192], %10 {strides = array<i32>} : memref<8x16x288xbf16, #tpu.memory_space<vmem>>, vector<8x16x32xbf16>,
    %12 = vector.extract_strided_slice %4 {offsets = [0, 1, 0], sizes = [10, 16, 32], strides = [1, 1, 1]} : vector<10x18x32xbf16> to vector<10x16x32xbf16>
    %13 = vector.extract_strided_slice %12 {offsets = [0, 0, 0], sizes = [8, 16, 32], strides = [1, 1, 1]} : vector<10x16x32xbf16> to vector<8x16x32xbf16>
    %c0_14 = arith.constant 0 : index
    %c0_15 = arith.constant 0 : index
    %c32 = arith.constant 32 : index
    %14 = vector.load %arg8[%c0_14, %c0_15, %c32] : memref<8x16x288xbf16, #tpu.memory_space<vmem>>, vector<8x16x32xbf16>
    tpu.vector_store %arg8[%c0_14, %c0_15, %c32], %13 {strides = array<i32>} : memref<8x16x288xbf16, #tpu.memory_space<vmem>>, vector<8x16x32xbf16>,
    %15 = vector.extract_strided_slice %12 {offsets = [1, 0, 0], sizes = [8, 16, 32], strides = [1, 1, 1]} : vector<10x16x32xbf16> to vector<8x16x32xbf16>
    %c0_16 = arith.constant 0 : index
    %c0_17 = arith.constant 0 : index
    %c128 = arith.constant 128 : index
    %16 = vector.load %arg8[%c0_16, %c0_17, %c128] : memref<8x16x288xbf16, #tpu.memory_space<vmem>>, vector<8x16x32xbf16>
    tpu.vector_store %arg8[%c0_16, %c0_17, %c128], %15 {strides = array<i32>} : memref<8x16x288xbf16, #tpu.memory_space<vmem>>, vector<8x16x32xbf16>,
    %17 = vector.extract_strided_slice %12 {offsets = [2, 0, 0], sizes = [8, 16, 32], strides = [1, 1, 1]} : vector<10x16x32xbf16> to vector<8x16x32xbf16>
    %c0_18 = arith.constant 0 : index
    %c0_19 = arith.constant 0 : index
    %c224 = arith.constant 224 : index
    %18 = vector.load %arg8[%c0_18, %c0_19, %c224] : memref<8x16x288xbf16, #tpu.memory_space<vmem>>, vector<8x16x32xbf16>
    tpu.vector_store %arg8[%c0_18, %c0_19, %c224], %17 {strides = array<i32>} : memref<8x16x288xbf16, #tpu.memory_space<vmem>>, vector<8x16x32xbf16>,
    %19 = vector.extract_strided_slice %4 {offsets = [0, 2, 0], sizes = [10, 16, 32], strides = [1, 1, 1]} : vector<10x18x32xbf16> to vector<10x16x32xbf16>
    %20 = vector.extract_strided_slice %19 {offsets = [0, 0, 0], sizes = [8, 16, 32], strides = [1, 1, 1]} : vector<10x16x32xbf16> to vector<8x16x32xbf16>
    %c0_20 = arith.constant 0 : index
    %c0_21 = arith.constant 0 : index
    %c64 = arith.constant 64 : index
    %21 = vector.load %arg8[%c0_20, %c0_21, %c64] : memref<8x16x288xbf16, #tpu.memory_space<vmem>>, vector<8x16x32xbf16>
    tpu.vector_store %arg8[%c0_20, %c0_21, %c64], %20 {strides = array<i32>} : memref<8x16x288xbf16, #tpu.memory_space<vmem>>, vector<8x16x32xbf16>,
    %22 = vector.extract_strided_slice %19 {offsets = [1, 0, 0], sizes = [8, 16, 32], strides = [1, 1, 1]} : vector<10x16x32xbf16> to vector<8x16x32xbf16>
    %c0_22 = arith.constant 0 : index
    %c0_23 = arith.constant 0 : index
    %c160 = arith.constant 160 : index
    %23 = vector.load %arg8[%c0_22, %c0_23, %c160] : memref<8x16x288xbf16, #tpu.memory_space<vmem>>, vector<8x16x32xbf16>
    tpu.vector_store %arg8[%c0_22, %c0_23, %c160], %22 {strides = array<i32>} : memref<8x16x288xbf16, #tpu.memory_space<vmem>>, vector<8x16x32xbf16>,
    %24 = vector.extract_strided_slice %19 {offsets = [2, 0, 0], sizes = [8, 16, 32], strides = [1, 1, 1]} : vector<10x16x32xbf16> to vector<8x16x32xbf16>
    %c0_24 = arith.constant 0 : index
    %c0_25 = arith.constant 0 : index
    %c256 = arith.constant 256 : index
    %25 = vector.load %arg8[%c0_24, %c0_25, %c256] : memref<8x16x288xbf16, #tpu.memory_space<vmem>>, vector<8x16x32xbf16>
    tpu.vector_store %arg8[%c0_24, %c0_25, %c256], %24 {strides = array<i32>} : memref<8x16x288xbf16, #tpu.memory_space<vmem>>, vector<8x16x32xbf16>,
    %c0_26 = arith.constant 0 : index
    %c0_27 = arith.constant 0 : index
    %c0_28 = arith.constant 0 : index
    %26 = vector.load %arg8[%c0_26, %c0_27, %c0_28] : memref<8x16x288xbf16, #tpu.memory_space<vmem>>, vector<8x16x288xbf16>
    %27 = vector.shape_cast %26 : vector<8x16x288xbf16> to vector<128x288xbf16>
    %c0_29 = arith.constant 0 : index
    %c0_30 = arith.constant 0 : index
    %28 = vector.load %arg4[%c0_29, %c0_30] : memref<288x128xbf16, #tpu.memory_space<vmem>>, vector<288x128xbf16>
    %cst = arith.constant dense<0.000000e+00> : vector<128x128xf32>
    %29 = tpu.matmul %27, %28, %cst {dimension_numbers = #tpu.dot_dimension_numbers<[1], [0], [0], [1], [0, 0, 1, 1], [], []>} : vector<128x288xbf16>, vector<288x128xbf16>, vector<128x128xf32> -> vector<128x128xf32>
    %c0_31 = arith.constant 0 : index
    %c0_32 = arith.constant 0 : index
    %30 = vector.load %arg5[%c0_31, %c0_32] : memref<1x128xf32, #tpu.memory_space<vmem>>, vector<1x128xf32>
    %31 = vector.broadcast %30 : vector<1x128xf32> to vector<128x128xf32>
    %32 = arith.mulf %29, %31 : vector<128x128xf32>
    %c0_33 = arith.constant 0 : index
    %c0_34 = arith.constant 0 : index
    %33 = vector.load %arg6[%c0_33, %c0_34] : memref<1x128xf32, #tpu.memory_space<vmem>>, vector<1x128xf32>
    %34 = vector.broadcast %33 : vector<1x128xf32> to vector<128x128xf32>
    %35 = arith.addf %32, %34 : vector<128x128xf32>
    %cst_35 = arith.constant 0.000000e+00 : f32
    %36 = vector.broadcast %cst_35 : f32 to vector<128x128xf32>
    %37 = arith.maximumf %35, %36 : vector<128x128xf32>
    %38 = vector.shape_cast %37 : vector<128x128xf32> to vector<1x8x16x128xf32>
    %39 = arith.truncf %38 : vector<1x8x16x128xf32> to vector<1x8x16x128xbf16>
    %c0_36 = arith.constant 0 : index
    %c0_37 = arith.constant 0 : index
    %c0_38 = arith.constant 0 : index
    %c0_39 = arith.constant 0 : index
    %40 = vector.load %arg7[%c0_36, %c0_37, %c0_38, %c0_39] : memref<1x8x16x128xbf16, #tpu.memory_space<vmem>>, vector<1x8x16x128xbf16>
    tpu.vector_store %arg7[%c0_36, %c0_37, %c0_38, %c0_39], %39 {strides = array<i32>} : memref<1x8x16x128xbf16, #tpu.memory_space<vmem>>, vector<1x8x16x128xbf16>,
    return
  }
  func.func @transform_0(%arg0: i32, %arg1: i32) -> (i32, i32, i32, i32) {
    %c0_i32 = arith.constant 0 : i32
    %c0_i32_0 = arith.constant 0 : i32
    %c0_i32_1 = arith.constant 0 : i32
    return %arg0, %arg1, %c0_i32, %c0_i32_0 : i32, i32, i32, i32
  }
  func.func @transform_1(%arg0: i32, %arg1: i32) -> (i32, i32, i32, i32) {
    %c1_i32 = arith.constant 1 : i32
    %0 = arith.addi %arg1, %c1_i32 : i32
    %c4_i32 = arith.constant 4 : i32
    %1 = arith.muli %0, %c4_i32 : i32
    %c0_i32 = arith.constant 0 : i32
    %c0_i32_0 = arith.constant 0 : i32
    %c0_i32_1 = arith.constant 0 : i32
    return %arg0, %1, %c0_i32, %c0_i32_0 : i32, i32, i32, i32
  }
  func.func @transform_2(%arg0: i32, %arg1: i32) -> (i32, i32) {
    %c0_i32 = arith.constant 0 : i32
    %c0_i32_0 = arith.constant 0 : i32
    %c0_i32_1 = arith.constant 0 : i32
    return %c0_i32, %c0_i32_0 : i32, i32
  }
  func.func @transform_3(%arg0: i32, %arg1: i32) -> (i32, i32) {
    %c0_i32 = arith.constant 0 : i32
    %c0_i32_0 = arith.constant 0 : i32
    %c0_i32_1 = arith.constant 0 : i32
    return %c0_i32, %c0_i32_0 : i32, i32
  }
  func.func @transform_4(%arg0: i32, %arg1: i32) -> (i32, i32) {
    %c0_i32 = arith.constant 0 : i32
    %c0_i32_0 = arith.constant 0 : i32
    %c0_i32_1 = arith.constant 0 : i32
    return %c0_i32, %c0_i32_0 : i32, i32
  }
  func.func @transform_5(%arg0: i32, %arg1: i32) -> (i32, i32, i32, i32) {
    %c0_i32 = arith.constant 0 : i32
    %c0_i32_0 = arith.constant 0 : i32
    %c0_i32_1 = arith.constant 0 : i32
    return %arg0, %arg1, %c0_i32, %c0_i32_0 : i32, i32, i32, i32
  }
}

</mosaic_0001>

<llo_original>
// kernel: double_conv2_forward_nhwc.1
$region0: #{double_conv2_forward_nhwc.1}
  #allocation0 [shape = 'u32[]', space=smem, size = 0x4, offset = 0x4, fixed_abs, tag = 'smem constant byte address 0x4 - core index']
  #allocation1 [shape = 'u32[144,128]{1,0:T(1,128)}', space=vmem, size = 0x12000, scoped, tag = 'internal scratch']
  #allocation2 [shape = 'bf16[8,16,288]{2,1,0:T(16,128)(2,1)}', space=vmem, size = 0x18000, scoped, tag = 'scratch operand']
  %s0 = inlined_call_operand.vmem [shape: bf16[2,18,18,32], index: 0, kind: input, shape index: {}, may-alias: {0,1}]
  %s1 = inlined_call_operand.vmem [shape: bf16[2,18,18,32], index: 1, kind: input, shape index: {}, may-alias: {0,1}]
  %s2 = inlined_call_operand.vmem [shape: bf16[288,128], index: 2, kind: input, shape index: {}]
  %s3 = inlined_call_operand.vmem [shape: f32[1,128], index: 3, kind: input, shape index: {}]
  %s4 = inlined_call_operand.vmem [shape: f32[1,128], index: 4, kind: input, shape index: {}]
  %s5 = inlined_call_operand.hbm [shape: bf16[2,16,16,128], index: 5, kind: output, shape index: {}]
  %s6 = sld [smem:[#allocation0]]
  $region53: #{double_conv2_forward_nhwc.1} parent=0
    _
  %s8 = ssub.s32 1, %s6
  %s9 = scalar_select 0, %s8, %s6
  $region1: #{double_conv2_forward_nhwc.1} parent=0
    #allocation3 [shape = 'u8[65536]{0}', space=vmem, size = 0x10000, scoped, tag = 'output window, operand 0']
    #allocation4 [shape = 's32[2]{0}', space=sflag, size = 0x8, scoped, tag = 'scoped memory for double_conv2_forward_nhwc.1']
    %10 = vsyncpa [#allocation4], 0
    %s11 = scalar_lea.sflag [#allocation4], 1
    %12 = vsyncpa %s11, 0
    loop: start=0, step=1, limit=6
    $region2: #{double_conv2_forward_nhwc.1} parent=1 // loop_pre_header
      _
    $region3: #{double_conv2_forward_nhwc.1} parent=1 // loop_header
      %s14 = sphi 0, %s18
      %p15 = scmp.ge.s32.totalorder %s14, 6
      %s21 = sphi 0, %s33
      %s22 = sphi 0, %s29
      %s23 = sphi 0, %s21
      %s24 = sphi 0, %s22
      %s25 = sphi 0, %s23
      %s26 = sphi 0, %s24
      %s38 = sphi 0, %s40
      %s41 = sphi 0, %s38
      %s42 = sphi 0, %s41
      %s58 = sphi 0, %s42
      %s70 = sphi 0, %s72
      %s73 = sphi 0, %s70
      %s74 = sphi 0, %s73
      %s90 = sphi 0, %s74
      %s94 = sphi 0, %s94
      %s96 = sphi 0, %s94
      %s97 = sphi 0, %s96
      %s111 = sphi 0, %s97
      %s115 = sphi 0, %s115
      %s117 = sphi 0, %s115
      %s118 = sphi 0, %s117
      %s132 = sphi 0, %s118
      %s136 = sphi 0, %s136
      %s138 = sphi 0, %s136
      %s139 = sphi 0, %s138
      %s153 = sphi 0, %s139
      %s161 = sphi 0, %s163
      %s164 = sphi 0, %s161
      %s165 = sphi 0, %s164
      %s181 = sphi 0, %s165
    $region4: #{double_conv2_forward_nhwc.1} parent=1 // loop_header_branch
      %17 = sbr.rel (%p15) target = $region8
    $region5: #{double_conv2_forward_nhwc.1} parent=1 // loop_body
      %s19 = ssub.s32 %s14, 1
      %s20 = ssub.s32 %s14, 2
      %s27 = sadd.s32 1, %s22
      %p28 = scmp.ge.s32.totalorder %s27, 2
      %s29 = scalar_select %p28, 0, %s27
      %s30 = sadd.s32 1, %s21
      %s31 = scalar_select %p28, %s30, %s21
      %p32 = scmp.ge.s32.totalorder %s31, 2
      %s33 = scalar_select %p32, 0, %s31
      %s34 = ssub.s32 %s21, %s33
      %s35 = ssub.s32 %s22, %s29
      %s36 = sor.u32 %s34, %s35
      %p37 = scmp.eq.s32.totalorder %s36, 0
      %s39 = sadd.s32 %s38, 1
      %s40 = scalar_select %p37, %s38, %s39
      %p43 = pneg %p37
      %p44 = scmp.eq.s32.totalorder %s14, 3
      %p45 = por %p43, %p44
      %p46 = scmp.ne.s32.totalorder %s38, %s41
      %p47 = scmp.eq.s32.totalorder %s14, 0
      %p48 = por %p46, %p47
      %p49 = scmp.ne.s32.totalorder %s38, %s41
      %p50 = scmp.eq.s32.totalorder %s19, 3
      %p51 = por %p49, %p50
      %p52 = scmp.ne.s32.totalorder %s41, %s42
      %p53 = scmp.eq.s32.totalorder %s19, 0
      %p54 = por %p52, %p53
      %p55 = scmp.ne.s32.totalorder %s41, %s42
      %p56 = scmp.eq.s32.totalorder %s20, 3
      %p57 = por %p55, %p56
      %p59 = scmp.ne.s32.totalorder %s42, %s58
      %p60 = scmp.eq.s32.totalorder %s20, 0
      %p61 = por %p59, %p60
      %s62 = sadd.s32 %s22, 1
      %s63 = smul.u32 %s62, 4
      %s64 = sadd.s32 %s29, 1
      %s65 = smul.u32 %s64, 4
      %s66 = ssub.s32 %s21, %s33
      %s67 = ssub.s32 %s63, %s65
      %s68 = sor.u32 %s66, %s67
      %p69 = scmp.eq.s32.totalorder %s68, 0
      %s71 = sadd.s32 %s70, 1
      %s72 = scalar_select %p69, %s70, %s71
      %p75 = pneg %p69
      %p76 = scmp.eq.s32.totalorder %s14, 3
      %p77 = por %p75, %p76
      %p78 = scmp.ne.s32.totalorder %s70, %s73
      %p79 = scmp.eq.s32.totalorder %s14, 0
      %p80 = por %p78, %p79
      %p81 = scmp.ne.s32.totalorder %s70, %s73
      %p82 = scmp.eq.s32.totalorder %s19, 3
      %p83 = por %p81, %p82
      %p84 = scmp.ne.s32.totalorder %s73, %s74
      %p85 = scmp.eq.s32.totalorder %s19, 0
      %p86 = por %p84, %p85
      %p87 = scmp.ne.s32.totalorder %s73, %s74
      %p88 = scmp.eq.s32.totalorder %s20, 3
      %p89 = por %p87, %p88
      %p91 = scmp.ne.s32.totalorder %s74, %s90
      %p92 = scmp.eq.s32.totalorder %s20, 0
      %p93 = por %p91, %p92
      %s95 = sadd.s32 %s94, 1
      %p98 = scmp.eq.s32.totalorder %s14, 3
      %p99 = scmp.ne.s32.totalorder %s94, %s96
      %p100 = scmp.eq.s32.totalorder %s14, 0
      %p101 = por %p99, %p100
      %p102 = scmp.ne.s32.totalorder %s94, %s96
      %p103 = scmp.eq.s32.totalorder %s19, 3
      %p104 = por %p102, %p103
      %p105 = scmp.ne.s32.totalorder %s96, %s97
      %p106 = scmp.eq.s32.totalorder %s19, 0
      %p107 = por %p105, %p106
      %p108 = scmp.ne.s32.totalorder %s96, %s97
      %p109 = scmp.eq.s32.totalorder %s20, 3
      %p110 = por %p108, %p109
      %p112 = scmp.ne.s32.totalorder %s97, %s111
      %p113 = scmp.eq.s32.totalorder %s20, 0
      %p114 = por %p112, %p113
      %s116 = sadd.s32 %s115, 1
      %p119 = scmp.eq.s32.totalorder %s14, 3
      %p120 = scmp.ne.s32.totalorder %s115, %s117
      %p121 = scmp.eq.s32.totalorder %s14, 0
      %p122 = por %p120, %p121
      %p123 = scmp.ne.s32.totalorder %s115, %s117
      %p124 = scmp.eq.s32.totalorder %s19, 3
      %p125 = por %p123, %p124
      %p126 = scmp.ne.s32.totalorder %s117, %s118
      %p127 = scmp.eq.s32.totalorder %s19, 0
      %p128 = por %p126, %p127
      %p129 = scmp.ne.s32.totalorder %s117, %s118
      %p130 = scmp.eq.s32.totalorder %s20, 3
      %p131 = por %p129, %p130
      %p133 = scmp.ne.s32.totalorder %s118, %s132
      %p134 = scmp.eq.s32.totalorder %s20, 0
      %p135 = por %p133, %p134
      %s137 = sadd.s32 %s136, 1
      %p140 = scmp.eq.s32.totalorder %s14, 3
      %p141 = scmp.ne.s32.totalorder %s136, %s138
      %p142 = scmp.eq.s32.totalorder %s14, 0
      %p143 = por %p141, %p142
      %p144 = scmp.ne.s32.totalorder %s136, %s138
      %p145 = scmp.eq.s32.totalorder %s19, 3
      %p146 = por %p144, %p145
      %p147 = scmp.ne.s32.totalorder %s138, %s139
      %p148 = scmp.eq.s32.totalorder %s19, 0
      %p149 = por %p147, %p148
      %p150 = scmp.ne.s32.totalorder %s138, %s139
      %p151 = scmp.eq.s32.totalorder %s20, 3
      %p152 = por %p150, %p151
      %p154 = scmp.ne.s32.totalorder %s139, %s153
      %p155 = scmp.eq.s32.totalorder %s20, 0
      %p156 = por %p154, %p155
      %s157 = ssub.s32 %s21, %s33
      %s158 = ssub.s32 %s22, %s29
      %s159 = sor.u32 %s157, %s158
      %p160 = scmp.eq.s32.totalorder %s159, 0
      %s162 = sadd.s32 %s161, 1
      %s163 = scalar_select %p160, %s161, %s162
      %p166 = pneg %p160
      %p167 = scmp.eq.s32.totalorder %s14, 3
      %p168 = por %p166, %p167
      %p169 = scmp.ne.s32.totalorder %s161, %s164
      %p170 = scmp.eq.s32.totalorder %s14, 0
      %p171 = por %p169, %p170
      %p172 = scmp.ne.s32.totalorder %s161, %s164
      %p173 = scmp.eq.s32.totalorder %s19, 3
      %p174 = por %p172, %p173
      %p175 = scmp.ne.s32.totalorder %s164, %s165
      %p176 = scmp.eq.s32.totalorder %s19, 0
      %p177 = por %p175, %p176
      %p178 = scmp.ne.s32.totalorder %s164, %s165
      %p179 = scmp.eq.s32.totalorder %s20, 3
      %p180 = por %p178, %p179
      %p182 = scmp.ne.s32.totalorder %s165, %s181
      %p183 = scmp.eq.s32.totalorder %s20, 0
      %p184 = por %p182, %p183
      %p185 = scmp.le.s32.totalorder 1, %s14
      %p186 = scmp.lt.s32.totalorder %s14, 5
      %p187 = pnand %p185, %p186
      %p188 = pneg %p187
      // Predicated region
      $region9: #{double_conv2_forward_nhwc.1} parent=5 // pred_check
        _
      $region10: #{double_conv2_forward_nhwc.1} parent=5 // pred_check_branch
        %190 = sbr.rel (%p187) target = $region12
      $region11: #{double_conv2_forward_nhwc.1} parent=5 // pred_region
        %s191 = ssub.s32 %s14, 1
        // Predicated region
        $region13: #{double_conv2_forward_nhwc.1} parent=11 // pred_check
          %p192 = pneg %p107
        $region14: #{double_conv2_forward_nhwc.1} parent=11 // pred_check_branch
          %194 = sbr.rel (%p192) target = $region16
        $region15: #{double_conv2_forward_nhwc.1} parent=11 // pred_region
          _
        $region16: #{double_conv2_forward_nhwc.1} parent=11 // pred_fallthru
          _
        // Predicated region
        $region17: #{double_conv2_forward_nhwc.1} parent=11 // pred_check
          %p195 = pneg %p128
        $region18: #{double_conv2_forward_nhwc.1} parent=11 // pred_check_branch
          %197 = sbr.rel (%p195) target = $region20
        $region19: #{double_conv2_forward_nhwc.1} parent=11 // pred_region
          _
        $region20: #{double_conv2_forward_nhwc.1} parent=11 // pred_fallthru
          _
        // Predicated region
        $region21: #{double_conv2_forward_nhwc.1} parent=11 // pred_check
          %p198 = pneg %p149
        $region22: #{double_conv2_forward_nhwc.1} parent=11 // pred_check_branch
          %200 = sbr.rel (%p198) target = $region24
        $region23: #{double_conv2_forward_nhwc.1} parent=11 // pred_region
          _
        $region24: #{double_conv2_forward_nhwc.1} parent=11 // pred_fallthru
          _
      $region12: #{double_conv2_forward_nhwc.1} parent=5 // pred_fallthru
        _
      %p201 = scmp.lt.s32.totalorder %s14, 4
      // Predicated region
      $region25: #{double_conv2_forward_nhwc.1} parent=5 // pred_check
        %p202 = pneg %p201
      $region26: #{double_conv2_forward_nhwc.1} parent=5 // pred_check_branch
        %204 = sbr.rel (%p202) target = $region28
      $region27: #{double_conv2_forward_nhwc.1} parent=5 // pred_region
        // Predicated region
        $region29: #{double_conv2_forward_nhwc.1} parent=27 // pred_check
          %p205 = pneg %p48
        $region30: #{double_conv2_forward_nhwc.1} parent=27 // pred_check_branch
          %207 = sbr.rel (%p205) target = $region32
        $region31: #{double_conv2_forward_nhwc.1} parent=27 // pred_region
          %s208 = smul.u32 8, %s22
          %s209 = ssub.s32 18, %s208
          %p210 = scmp.lt.s32.totalorder %s209, 8
          %s211 = scalar_select %p210, %s209, 8
          %s212 = smul.u32 64, %s211
          %s213 = smul.u32 %s212, 3
          %p214 = scmp.lt.s32.totalorder %s21, 1
          %s215 = scalar_select %p214, %s21, 1
          %p216 = scmp.lt.s32.totalorder %s208, 17
          %s217 = scalar_select %p216, %s208, 17
          %s218 = smul.addr %s217, 3
          %s219 = smul.addr %s215, 54
          %s220 = sadd.s32 %s218, %s219
          %s221 = smul.addr %s220, 4
          %s222 = scalar_lea.vmem %s0, %s221
          %s223 = smul.u32 8, %s22
          %s224 = ssub.s32 18, %s223
          %p225 = scmp.lt.s32.totalorder %s224, 8
          %s226 = scalar_select %p225, %s224, 8
          %s227 = smul.u32 64, %s226
          %s228 = smul.u32 %s227, 3
        $region32: #{double_conv2_forward_nhwc.1} parent=27 // pred_fallthru
          _
        // Predicated region
        $region33: #{double_conv2_forward_nhwc.1} parent=27 // pred_check
          %p229 = pneg %p80
        $region34: #{double_conv2_forward_nhwc.1} parent=27 // pred_check_branch
          %231 = sbr.rel (%p229) target = $region36
        $region35: #{double_conv2_forward_nhwc.1} parent=27 // pred_region
          %s232 = sadd.s32 %s22, 1
          %s233 = smul.u32 %s232, 4
          %s234 = smul.u32 2, %s233
          %p235 = scmp.lt.s32.totalorder %s21, 1
          %s236 = scalar_select %p235, %s21, 1
          %p237 = scmp.lt.s32.totalorder %s234, 17
          %s238 = scalar_select %p237, %s234, 17
          %s239 = smul.addr %s238, 3
          %s240 = smul.addr %s236, 54
          %s241 = sadd.s32 %s239, %s240
          %s242 = smul.addr %s241, 4
          %s243 = scalar_lea.vmem %s1, %s242
          %s244 = sadd.s32 %s22, 1
          %s245 = smul.u32 %s244, 4
          %s246 = smul.u32 2, %s245
        $region36: #{double_conv2_forward_nhwc.1} parent=27 // pred_fallthru
          _
      $region28: #{double_conv2_forward_nhwc.1} parent=5 // pred_fallthru
        _
      %p247 = scmp.le.s32.totalorder 1, %s14
      %p248 = scmp.lt.s32.totalorder %s14, 5
      %p249 = pnand %p247, %p248
      %p250 = pneg %p249
      // Predicated region
      $region37: #{double_conv2_forward_nhwc.1} parent=5 // pred_check
        _
      $region38: #{double_conv2_forward_nhwc.1} parent=5 // pred_check_branch
        %252 = sbr.rel (%p249) target = $region40
      $region39: #{double_conv2_forward_nhwc.1} parent=5 // pred_region
        %s253 = ssub.s32 %s14, 1
        %s254 = smul.u32 8, %s24
        %s255 = ssub.s32 18, %s254
        %p256 = scmp.lt.s32.totalorder %s255, 8
        %s257 = scalar_select %p256, %s255, 8
        %s258 = smul.u32 64, %s257
        %s259 = smul.u32 %s258, 3
        %p260 = scmp.lt.s32.totalorder %s23, 1
        %s261 = scalar_select %p260, %s23, 1
        %p262 = scmp.lt.s32.totalorder %s254, 17
        %s263 = scalar_select %p262, %s254, 17
        %s264 = smul.addr %s263, 3
        %s265 = smul.addr %s261, 54
        %s266 = sadd.s32 %s264, %s265
        %s267 = smul.addr %s266, 4
        %s268 = scalar_lea.vmem %s0, %s267
        %p269 = pneg %p54
        %p270 = pneg %p51
        %s271 = sadd.s32 %s24, 1
        %s272 = smul.u32 %s271, 4
        %s273 = smul.u32 2, %s272
        %p274 = scmp.lt.s32.totalorder %s23, 1
        %s275 = scalar_select %p274, %s23, 1
        %p276 = scmp.lt.s32.totalorder %s273, 17
        %s277 = scalar_select %p276, %s273, 17
        %s278 = smul.addr %s277, 3
        %s279 = smul.addr %s275, 54
        %s280 = sadd.s32 %s278, %s279
        %s281 = smul.addr %s280, 4
        %s282 = scalar_lea.vmem %s1, %s281
        %p283 = pneg %p86
        %p284 = pneg %p83
        %p285 = pneg %p107
        %p286 = pneg %p104
        %p287 = pneg %p128
        %p288 = pneg %p125
        %p289 = pneg %p149
        %p290 = pneg %p146
        %p291 = pneg %p177
        %p292 = pneg %p174
        %s293 = sand.u32 %s164, 1
        %s294 = scalar_lea.sflag [#allocation4], %s293
        %s295 = sand.u32 %s164, 1
        %s296 = smul.addr %s295, 64
        %s297 = scalar_lea.vmem [#allocation3], %s296
        %s298 = smul.u32 8, %s24
        %s299 = ssub.s32 18, %s298
        %p300 = scmp.lt.s32.totalorder %s299, 8
        %s301 = scalar_select %p300, %s299, 8
        %s302 = smul.u32 64, %s301
        %s303 = smul.u32 %s302, 3
        %p304 = scmp.lt.s32.totalorder %s23, 1
        %s305 = scalar_select %p304, %s23, 1
        %p306 = scmp.lt.s32.totalorder %s298, 17
        %s307 = scalar_select %p306, %s298, 17
        %s308 = smul.addr %s307, 3
        %s309 = smul.addr %s305, 54
        %s310 = sadd.s32 %s308, %s309
        %s311 = smul.addr %s310, 4
        %s312 = scalar_lea.vmem %s0, %s311
        %s313 = smul.u32 8, %s24
        %s314 = ssub.s32 18, %s313
        %p315 = scmp.lt.s32.totalorder %s314, 8
        %s316 = scalar_select %p315, %s314, 8
        %s317 = smul.u32 64, %s316
        %s318 = smul.u32 %s317, 3
        %s319 = sadd.s32 %s24, 1
        %s320 = smul.u32 %s319, 4
        %s321 = smul.u32 2, %s320
        %p322 = scmp.lt.s32.totalorder %s23, 1
        %s323 = scalar_select %p322, %s23, 1
        %p324 = scmp.lt.s32.totalorder %s321, 17
        %s325 = scalar_select %p324, %s321, 17
        %s326 = smul.addr %s325, 3
        %s327 = smul.addr %s323, 54
        %s328 = sadd.s32 %s326, %s327
        %s329 = smul.addr %s328, 4
        %s330 = scalar_lea.vmem %s1, %s329
        %s331 = sadd.s32 %s24, 1
        %s332 = smul.u32 %s331, 4
        %s333 = smul.u32 2, %s332
        %s334 = smul.u32 8, %s24
        %v336 = vld [vmem:[%s312] sm:$0xf]
        %v337 = vld [vmem:[%s312 + $0x4] sm:$0xf]
        %v338 = vld [vmem:[%s312 + $0x8] sm:$0x1]
        %v339 = vld [vmem:[%s312 + $0xc] sm:$0xf]
        %v340 = vld [vmem:[%s312 + $0x10] sm:$0xf]
        %v341 = vld [vmem:[%s312 + $0x14] sm:$0x1]
        %v342 = vld [vmem:[%s312 + $0x18] sm:$0xf]
        %v343 = vld [vmem:[%s312 + $0x1c] sm:$0xf]
        %v344 = vld [vmem:[%s312 + $0x20] sm:$0x1]
        %v345 = vld [vmem:[%s312 + $0x24] sm:$0xf]
        %v346 = vld [vmem:[%s312 + $0x28] sm:$0xf]
        %v347 = vld [vmem:[%s312 + $0x2c] sm:$0x1]
        %v348 = vld [vmem:[%s312 + $0x30] sm:$0xf]
        %v349 = vld [vmem:[%s312 + $0x34] sm:$0xf]
        %v350 = vld [vmem:[%s312 + $0x38] sm:$0x1]
        %v351 = vld [vmem:[%s312 + $0x3c] sm:$0xf]
        %v352 = vld [vmem:[%s312 + $0x40] sm:$0xf]
        %v353 = vld [vmem:[%s312 + $0x44] sm:$0x1]
        %v354 = vld [vmem:[%s312 + $0x48] sm:$0xf]
        %v355 = vld [vmem:[%s312 + $0x4c] sm:$0xf]
        %v356 = vld [vmem:[%s312 + $0x50] sm:$0x1]
        %v357 = vld [vmem:[%s312 + $0x54] sm:$0xf]
        %v358 = vld [vmem:[%s312 + $0x58] sm:$0xf]
        %v359 = vld [vmem:[%s312 + $0x5c] sm:$0x1]
        %v360 = vld [vmem:[%s330] sm:$0xf]
        %v361 = vld [vmem:[%s330 + $0x4] sm:$0xf]
        %v362 = vld [vmem:[%s330 + $0x8] sm:$0x1]
        %v363 = vld [vmem:[%s330 + $0xc] sm:$0xf]
        %v364 = vld [vmem:[%s330 + $0x10] sm:$0xf]
        %v365 = vld [vmem:[%s330 + $0x14] sm:$0x1]
        %v382 = vunpack.c.l.b16 %v336
        %v383 = vunpack.c.l.b16 %v337
        %v384 = vunpack.c.l.b16 %v339
        %v385 = vunpack.c.l.b16 %v340
        %v386 = vunpack.c.l.b16 %v342
        %v387 = vunpack.c.l.b16 %v343
        %v388 = vunpack.c.l.b16 %v345
        %v389 = vunpack.c.l.b16 %v346
        %v390 = vunpack.c.l.b16 %v348
        %v391 = vunpack.c.l.b16 %v349
        %v392 = vunpack.c.l.b16 %v351
        %v393 = vunpack.c.l.b16 %v352
        %v394 = vunpack.c.l.b16 %v354
        %v395 = vunpack.c.l.b16 %v355
        %v396 = vunpack.c.l.b16 %v357
        %v397 = vunpack.c.l.b16 %v358
        %v398 = vpack.c.b16 %v383, %v382
        %v399 = vpack.c.b16 %v385, %v384
        %v400 = vpack.c.b16 %v387, %v386
        %v401 = vpack.c.b16 %v389, %v388
        %v402 = vpack.c.b16 %v391, %v390
        %v403 = vpack.c.b16 %v393, %v392
        %v404 = vpack.c.b16 %v395, %v394
        %v405 = vpack.c.b16 %v397, %v396
        %vm414 = vcmask 261120
        %415 = vst.msk [vmem:[#allocation2] sm:$0xff] %vm414, %v398
        %416 = vst.msk [vmem:[#allocation2 + $0x18] sm:$0xff] %vm414, %v399
        %417 = vst.msk [vmem:[#allocation2 + $0x30] sm:$0xff] %vm414, %v400
        %418 = vst.msk [vmem:[#allocation2 + $0x48] sm:$0xff] %vm414, %v401
        %419 = vst.msk [vmem:[#allocation2 + $0x60] sm:$0xff] %vm414, %v402
        %420 = vst.msk [vmem:[#allocation2 + $0x78] sm:$0xff] %vm414, %v403
        %421 = vst.msk [vmem:[#allocation2 + $0x90] sm:$0xff] %vm414, %v404
        %422 = vst.msk [vmem:[#allocation2 + $0xa8] sm:$0xff] %vm414, %v405
        %v425 = vunpack.c.l.b16 %v360
        %v426 = vunpack.c.l.b16 %v361
        %v427 = vpack.c.b16 %v426, %v425
        %428 = vrot.lane.b32.xlu0 %v399, 96
        %v429 = vpop.permute.xlu0 %428
        %430 = vrot.lane.b32.xlu0 %v400, 96
        %v431 = vpop.permute.xlu0 %430
        %432 = vrot.lane.b32.xlu0 %v401, 96
        %v433 = vpop.permute.xlu0 %432
        %434 = vrot.lane.b32.xlu0 %v402, 96
        %v435 = vpop.permute.xlu0 %434
        %436 = vrot.lane.b32.xlu0 %v403, 96
        %v437 = vpop.permute.xlu0 %436
        %438 = vrot.lane.b32.xlu0 %v404, 96
        %v439 = vpop.permute.xlu0 %438
        %440 = vrot.lane.b32.xlu0 %v405, 96
        %v441 = vpop.permute.xlu0 %440
        %442 = vrot.lane.b32.xlu0 %v427, 96
        %v443 = vpop.permute.xlu0 %442
        %vm452 = vcmask 1048320
        %453 = vst.msk [vmem:[#allocation2] sm:$0xff] %vm452, %v429
        %454 = vst.msk [vmem:[#allocation2 + $0x18] sm:$0xff] %vm452, %v431
        %455 = vst.msk [vmem:[#allocation2 + $0x30] sm:$0xff] %vm452, %v433
        %456 = vst.msk [vmem:[#allocation2 + $0x48] sm:$0xff] %vm452, %v435
        %457 = vst.msk [vmem:[#allocation2 + $0x60] sm:$0xff] %vm452, %v437
        %458 = vst.msk [vmem:[#allocation2 + $0x78] sm:$0xff] %vm452, %v439
        %459 = vst.msk [vmem:[#allocation2 + $0x90] sm:$0xff] %vm452, %v441
        %460 = vst.msk [vmem:[#allocation2 + $0xa8] sm:$0xff] %vm452, %v443
        %v463 = vunpack.c.l.b16 %v363
        %v464 = vunpack.c.l.b16 %v364
        %v465 = vpack.c.b16 %v464, %v463
        %466 = vrot.lane.b32.xlu0 %v400, 64
        %v467 = vpop.permute.xlu0 %466
        %468 = vrot.lane.b32.xlu0 %v401, 64
        %v469 = vpop.permute.xlu0 %468
        %470 = vrot.lane.b32.xlu0 %v402, 64
        %v471 = vpop.permute.xlu0 %470
        %472 = vrot.lane.b32.xlu0 %v403, 64
        %v473 = vpop.permute.xlu0 %472
        %474 = vrot.lane.b32.xlu0 %v404, 64
        %v475 = vpop.permute.xlu0 %474
        %476 = vrot.lane.b32.xlu0 %v405, 64
        %v477 = vpop.permute.xlu0 %476
        %478 = vrot.lane.b32.xlu0 %v427, 64
        %v479 = vpop.permute.xlu0 %478
        %480 = vrot.lane.b32.xlu0 %v465, 64
        %v481 = vpop.permute.xlu0 %480
        %vm490 = vcmask 785920
        %491 = vst.msk [vmem:[#allocation2 + $0x8] sm:$0xff] %vm490, %v467
        %492 = vst.msk [vmem:[#allocation2 + $0x20] sm:$0xff] %vm490, %v469
        %493 = vst.msk [vmem:[#allocation2 + $0x38] sm:$0xff] %vm490, %v471
        %494 = vst.msk [vmem:[#allocation2 + $0x50] sm:$0xff] %vm490, %v473
        %495 = vst.msk [vmem:[#allocation2 + $0x68] sm:$0xff] %vm490, %v475
        %496 = vst.msk [vmem:[#allocation2 + $0x80] sm:$0xff] %vm490, %v477
        %497 = vst.msk [vmem:[#allocation2 + $0x98] sm:$0xff] %vm490, %v479
        %498 = vst.msk [vmem:[#allocation2 + $0xb0] sm:$0xff] %vm490, %v481
        %v507 = vunpack.c.l.b16 %v338
        %v508 = vunpack.c.l.b16 %v341
        %v509 = vunpack.c.l.b16 %v344
        %v510 = vunpack.c.l.b16 %v347
        %v511 = vunpack.c.l.b16 %v350
        %v512 = vunpack.c.l.b16 %v353
        %v513 = vunpack.c.l.b16 %v356
        %v514 = vunpack.c.l.b16 %v359
        %v515 = vpack.c.b16 %v507, %v507
        %v516 = vpack.c.b16 %v508, %v508
        %v517 = vpack.c.b16 %v509, %v509
        %v518 = vpack.c.b16 %v510, %v510
        %v519 = vpack.c.b16 %v511, %v511
        %v520 = vpack.c.b16 %v512, %v512
        %v521 = vpack.c.b16 %v513, %v513
        %v522 = vpack.c.b16 %v514, %v514
        %vm523 = vsmask.f32 7424
        %v525 = vshrl.u32 %v398, 16
        %v527 = vshll.u32 %v398, 16
        %v529 = vrot.slane %v527, 1
        %v530 = vor.u32 %v525, %v529
        %v532 = vshll.u32 %v515, 16
        %v534 = vrot.slane %v532, 1
        %v535 = vsel %vm523, %v530, %v534
        %v537 = vshrl.u32 %v399, 16
        %v539 = vshll.u32 %v399, 16
        %v541 = vrot.slane %v539, 1
        %v542 = vor.u32 %v537, %v541
        %v544 = vshll.u32 %v516, 16
        %v546 = vrot.slane %v544, 1
        %v547 = vsel %vm523, %v542, %v546
        %v549 = vshrl.u32 %v400, 16
        %v551 = vshll.u32 %v400, 16
        %v553 = vrot.slane %v551, 1
        %v554 = vor.u32 %v549, %v553
        %v556 = vshll.u32 %v517, 16
        %v558 = vrot.slane %v556, 1
        %v559 = vsel %vm523, %v554, %v558
        %v561 = vshrl.u32 %v401, 16
        %v563 = vshll.u32 %v401, 16
        %v565 = vrot.slane %v563, 1
        %v566 = vor.u32 %v561, %v565
        %v568 = vshll.u32 %v518, 16
        %v570 = vrot.slane %v568, 1
        %v571 = vsel %vm523, %v566, %v570
        %v573 = vshrl.u32 %v402, 16
        %v575 = vshll.u32 %v402, 16
        %v577 = vrot.slane %v575, 1
        %v578 = vor.u32 %v573, %v577
        %v580 = vshll.u32 %v519, 16
        %v582 = vrot.slane %v580, 1
        %v583 = vsel %vm523, %v578, %v582
        %v585 = vshrl.u32 %v403, 16
        %v587 = vshll.u32 %v403, 16
        %v589 = vrot.slane %v587, 1
        %v590 = vor.u32 %v585, %v589
        %v592 = vshll.u32 %v520, 16
        %v594 = vrot.slane %v592, 1
        %v595 = vsel %vm523, %v590, %v594
        %v597 = vshrl.u32 %v404, 16
        %v599 = vshll.u32 %v404, 16
        %v601 = vrot.slane %v599, 1
        %v602 = vor.u32 %v597, %v601
        %v604 = vshll.u32 %v521, 16
        %v606 = vrot.slane %v604, 1
        %v607 = vsel %vm523, %v602, %v606
        %v609 = vshrl.u32 %v405, 16
        %v611 = vshll.u32 %v405, 16
        %v613 = vrot.slane %v611, 1
        %v614 = vor.u32 %v609, %v613
        %v616 = vshll.u32 %v522, 16
        %v618 = vrot.slane %v616, 1
        %v619 = vsel %vm523, %v614, %v618
        %620 = vrot.lane.b32.xlu0 %v535, 32
        %v621 = vpop.permute.xlu0 %620
        %622 = vrot.lane.b32.xlu0 %v547, 32
        %v623 = vpop.permute.xlu0 %622
        %624 = vrot.lane.b32.xlu0 %v559, 32
        %v625 = vpop.permute.xlu0 %624
        %626 = vrot.lane.b32.xlu0 %v571, 32
        %v627 = vpop.permute.xlu0 %626
        %628 = vrot.lane.b32.xlu0 %v583, 32
        %v629 = vpop.permute.xlu0 %628
        %630 = vrot.lane.b32.xlu0 %v595, 32
        %v631 = vpop.permute.xlu0 %630
        %632 = vrot.lane.b32.xlu0 %v607, 32
        %v633 = vpop.permute.xlu0 %632
        %634 = vrot.lane.b32.xlu0 %v619, 32
        %v635 = vpop.permute.xlu0 %634
        %vm644 = vcmask 523520
        %645 = vst.msk [vmem:[#allocation2] sm:$0xff] %vm644, %v621
        %646 = vst.msk [vmem:[#allocation2 + $0x18] sm:$0xff] %vm644, %v623
        %647 = vst.msk [vmem:[#allocation2 + $0x30] sm:$0xff] %vm644, %v625
        %648 = vst.msk [vmem:[#allocation2 + $0x48] sm:$0xff] %vm644, %v627
        %649 = vst.msk [vmem:[#allocation2 + $0x60] sm:$0xff] %vm644, %v629
        %650 = vst.msk [vmem:[#allocation2 + $0x78] sm:$0xff] %vm644, %v631
        %651 = vst.msk [vmem:[#allocation2 + $0x90] sm:$0xff] %vm644, %v633
        %652 = vst.msk [vmem:[#allocation2 + $0xa8] sm:$0xff] %vm644, %v635
        %v654 = vunpack.c.l.b16 %v362
        %v655 = vpack.c.b16 %v654, %v654
        %v657 = vshrl.u32 %v427, 16
        %v659 = vshll.u32 %v427, 16
        %v661 = vrot.slane %v659, 1
        %v662 = vor.u32 %v657, %v661
        %v664 = vshll.u32 %v655, 16
        %v666 = vrot.slane %v664, 1
        %v667 = vsel %vm523, %v662, %v666
        %676 = vst.msk [vmem:[#allocation2 + $0x8] sm:$0xff] %vm414, %v547
        %677 = vst.msk [vmem:[#allocation2 + $0x20] sm:$0xff] %vm414, %v559
        %678 = vst.msk [vmem:[#allocation2 + $0x38] sm:$0xff] %vm414, %v571
        %679 = vst.msk [vmem:[#allocation2 + $0x50] sm:$0xff] %vm414, %v583
        %680 = vst.msk [vmem:[#allocation2 + $0x68] sm:$0xff] %vm414, %v595
        %681 = vst.msk [vmem:[#allocation2 + $0x80] sm:$0xff] %vm414, %v607
        %682 = vst.msk [vmem:[#allocation2 + $0x98] sm:$0xff] %vm414, %v619
        %683 = vst.msk [vmem:[#allocation2 + $0xb0] sm:$0xff] %vm414, %v667
        %v685 = vunpack.c.l.b16 %v365
        %v686 = vpack.c.b16 %v685, %v685
        %v688 = vshrl.u32 %v465, 16
        %v690 = vshll.u32 %v465, 16
        %v692 = vrot.slane %v690, 1
        %v693 = vor.u32 %v688, %v692
        %v695 = vshll.u32 %v686, 16
        %v697 = vrot.slane %v695, 1
        %v698 = vsel %vm523, %v693, %v697
        %699 = vrot.lane.b32.xlu0 %v559, 96
        %v700 = vpop.permute.xlu0 %699
        %701 = vrot.lane.b32.xlu0 %v571, 96
        %v702 = vpop.permute.xlu0 %701
        %703 = vrot.lane.b32.xlu0 %v583, 96
        %v704 = vpop.permute.xlu0 %703
        %705 = vrot.lane.b32.xlu0 %v595, 96
        %v706 = vpop.permute.xlu0 %705
        %707 = vrot.lane.b32.xlu0 %v607, 96
        %v708 = vpop.permute.xlu0 %707
        %709 = vrot.lane.b32.xlu0 %v619, 96
        %v710 = vpop.permute.xlu0 %709
        %711 = vrot.lane.b32.xlu0 %v667, 96
        %v712 = vpop.permute.xlu0 %711
        %713 = vrot.lane.b32.xlu0 %v698, 96
        %v714 = vpop.permute.xlu0 %713
        %723 = vst.msk [vmem:[#allocation2 + $0x8] sm:$0xff] %vm452, %v700
        %724 = vst.msk [vmem:[#allocation2 + $0x20] sm:$0xff] %vm452, %v702
        %725 = vst.msk [vmem:[#allocation2 + $0x38] sm:$0xff] %vm452, %v704
        %726 = vst.msk [vmem:[#allocation2 + $0x50] sm:$0xff] %vm452, %v706
        %727 = vst.msk [vmem:[#allocation2 + $0x68] sm:$0xff] %vm452, %v708
        %728 = vst.msk [vmem:[#allocation2 + $0x80] sm:$0xff] %vm452, %v710
        %729 = vst.msk [vmem:[#allocation2 + $0x98] sm:$0xff] %vm452, %v712
        %730 = vst.msk [vmem:[#allocation2 + $0xb0] sm:$0xff] %vm452, %v714
        %vm731 = vcmask 1046528
        %v732 = vrot.slane %v398, 1
        %v733 = vrot.slane %v515, 1
        %v734 = vsel %vm731, %v732, %v733
        %v735 = vrot.slane %v399, 1
        %v736 = vrot.slane %v516, 1
        %v737 = vsel %vm731, %v735, %v736
        %v738 = vrot.slane %v400, 1
        %v739 = vrot.slane %v517, 1
        %v740 = vsel %vm731, %v738, %v739
        %v741 = vrot.slane %v401, 1
        %v742 = vrot.slane %v518, 1
        %v743 = vsel %vm731, %v741, %v742
        %v744 = vrot.slane %v402, 1
        %v745 = vrot.slane %v519, 1
        %v746 = vsel %vm731, %v744, %v745
        %v747 = vrot.slane %v403, 1
        %v748 = vrot.slane %v520, 1
        %v749 = vsel %vm731, %v747, %v748
        %v750 = vrot.slane %v404, 1
        %v751 = vrot.slane %v521, 1
        %v752 = vsel %vm731, %v750, %v751
        %v753 = vrot.slane %v405, 1
        %v754 = vrot.slane %v522, 1
        %v755 = vsel %vm731, %v753, %v754
        %756 = vrot.lane.b32.xlu0 %v734, 64
        %v757 = vpop.permute.xlu0 %756
        %758 = vrot.lane.b32.xlu0 %v737, 64
        %v759 = vpop.permute.xlu0 %758
        %760 = vrot.lane.b32.xlu0 %v740, 64
        %v761 = vpop.permute.xlu0 %760
        %762 = vrot.lane.b32.xlu0 %v743, 64
        %v763 = vpop.permute.xlu0 %762
        %764 = vrot.lane.b32.xlu0 %v746, 64
        %v765 = vpop.permute.xlu0 %764
        %766 = vrot.lane.b32.xlu0 %v749, 64
        %v767 = vpop.permute.xlu0 %766
        %768 = vrot.lane.b32.xlu0 %v752, 64
        %v769 = vpop.permute.xlu0 %768
        %770 = vrot.lane.b32.xlu0 %v755, 64
        %v771 = vpop.permute.xlu0 %770
        %780 = vst.msk [vmem:[#allocation2] sm:$0xff] %vm490, %v757
        %781 = vst.msk [vmem:[#allocation2 + $0x18] sm:$0xff] %vm490, %v759
        %782 = vst.msk [vmem:[#allocation2 + $0x30] sm:$0xff] %vm490, %v761
        %783 = vst.msk [vmem:[#allocation2 + $0x48] sm:$0xff] %vm490, %v763
        %784 = vst.msk [vmem:[#allocation2 + $0x60] sm:$0xff] %vm490, %v765
        %785 = vst.msk [vmem:[#allocation2 + $0x78] sm:$0xff] %vm490, %v767
        %786 = vst.msk [vmem:[#allocation2 + $0x90] sm:$0xff] %vm490, %v769
        %787 = vst.msk [vmem:[#allocation2 + $0xa8] sm:$0xff] %vm490, %v771
        %v788 = vrot.slane %v427, 1
        %v789 = vrot.slane %v655, 1
        %v790 = vsel %vm731, %v788, %v789
        %791 = vrot.lane.b32.xlu0 %v737, 32
        %v792 = vpop.permute.xlu0 %791
        %793 = vrot.lane.b32.xlu0 %v740, 32
        %v794 = vpop.permute.xlu0 %793
        %795 = vrot.lane.b32.xlu0 %v743, 32
        %v796 = vpop.permute.xlu0 %795
        %797 = vrot.lane.b32.xlu0 %v746, 32
        %v798 = vpop.permute.xlu0 %797
        %799 = vrot.lane.b32.xlu0 %v749, 32
        %v800 = vpop.permute.xlu0 %799
        %801 = vrot.lane.b32.xlu0 %v752, 32
        %v802 = vpop.permute.xlu0 %801
        %803 = vrot.lane.b32.xlu0 %v755, 32
        %v804 = vpop.permute.xlu0 %803
        %805 = vrot.lane.b32.xlu0 %v790, 32
        %v806 = vpop.permute.xlu0 %805
        %815 = vst.msk [vmem:[#allocation2 + $0x8] sm:$0xff] %vm644, %v792
        %816 = vst.msk [vmem:[#allocation2 + $0x20] sm:$0xff] %vm644, %v794
        %817 = vst.msk [vmem:[#allocation2 + $0x38] sm:$0xff] %vm644, %v796
        %818 = vst.msk [vmem:[#allocation2 + $0x50] sm:$0xff] %vm644, %v798
        %819 = vst.msk [vmem:[#allocation2 + $0x68] sm:$0xff] %vm644, %v800
        %820 = vst.msk [vmem:[#allocation2 + $0x80] sm:$0xff] %vm644, %v802
        %821 = vst.msk [vmem:[#allocation2 + $0x98] sm:$0xff] %vm644, %v804
        %822 = vst.msk [vmem:[#allocation2 + $0xb0] sm:$0xff] %vm644, %v806
        %v823 = vrot.slane %v465, 1
        %v824 = vrot.slane %v686, 1
        %v825 = vsel %vm731, %v823, %v824
        %834 = vst.msk [vmem:[#allocation2 + $0x10] sm:$0xff] %vm414, %v740
        %835 = vst.msk [vmem:[#allocation2 + $0x28] sm:$0xff] %vm414, %v743
        %836 = vst.msk [vmem:[#allocation2 + $0x40] sm:$0xff] %vm414, %v746
        %837 = vst.msk [vmem:[#allocation2 + $0x58] sm:$0xff] %vm414, %v749
        %838 = vst.msk [vmem:[#allocation2 + $0x70] sm:$0xff] %vm414, %v752
        %839 = vst.msk [vmem:[#allocation2 + $0x88] sm:$0xff] %vm414, %v755
        %840 = vst.msk [vmem:[#allocation2 + $0xa0] sm:$0xff] %vm414, %v790
        %841 = vst.msk [vmem:[#allocation2 + $0xb8] sm:$0xff] %vm414, %v825
        %v842 = vld [vmem:[#allocation2] sm:$0xff]
        %v843 = vld [vmem:[#allocation2 + $0x8] sm:$0xff]
        %v844 = vld [vmem:[#allocation2 + $0x10] sm:$0xff]
        %v845 = vld [vmem:[#allocation2 + $0x18] sm:$0xff]
        %v846 = vld [vmem:[#allocation2 + $0x20] sm:$0xff]
        %v847 = vld [vmem:[#allocation2 + $0x28] sm:$0xff]
        %v848 = vld [vmem:[#allocation2 + $0x30] sm:$0xff]
        %v849 = vld [vmem:[#allocation2 + $0x38] sm:$0xff]
        %v850 = vld [vmem:[#allocation2 + $0x40] sm:$0xff]
        %v851 = vld [vmem:[#allocation2 + $0x48] sm:$0xff]
        %v852 = vld [vmem:[#allocation2 + $0x50] sm:$0xff]
        %v853 = vld [vmem:[#allocation2 + $0x58] sm:$0xff]
        %v854 = vld [vmem:[#allocation2 + $0x60] sm:$0xff]
        %v855 = vld [vmem:[#allocation2 + $0x68] sm:$0xff]
        %v856 = vld [vmem:[#allocation2 + $0x70] sm:$0xff]
        %v857 = vld [vmem:[#allocation2 + $0x78] sm:$0xff]
        %v858 = vld [vmem:[#allocation2 + $0x80] sm:$0xff]
        %v859 = vld [vmem:[#allocation2 + $0x88] sm:$0xff]
        %v860 = vld [vmem:[#allocation2 + $0x90] sm:$0xff]
        %v861 = vld [vmem:[#allocation2 + $0x98] sm:$0xff]
        %v862 = vld [vmem:[#allocation2 + $0xa0] sm:$0xff]
        %v863 = vld [vmem:[#allocation2 + $0xa8] sm:$0xff]
        %v864 = vld [vmem:[#allocation2 + $0xb0] sm:$0xff]
        %v865 = vld [vmem:[#allocation2 + $0xb8] sm:$0xff]
        %v866 = vld [vmem:[%s2] sm:$0xf]
        %v867 = vld [vmem:[%s2 + $0x4] sm:$0xf]
        %v868 = vld [vmem:[%s2 + $0x8] sm:$0xf]
        %v869 = vld [vmem:[%s2 + $0xc] sm:$0xf]
        %v870 = vld [vmem:[%s2 + $0x10] sm:$0xf]
        %v871 = vld [vmem:[%s2 + $0x14] sm:$0xf]
        %v872 = vld [vmem:[%s2 + $0x18] sm:$0xf]
        %v873 = vld [vmem:[%s2 + $0x1c] sm:$0xf]
        %v874 = vld [vmem:[%s2 + $0x20] sm:$0xf]
        %v875 = vld [vmem:[%s2 + $0x24] sm:$0xf]
        %v876 = vld [vmem:[%s2 + $0x28] sm:$0xf]
        %v877 = vld [vmem:[%s2 + $0x2c] sm:$0xf]
        %v878 = vld [vmem:[%s2 + $0x30] sm:$0xf]
        %v879 = vld [vmem:[%s2 + $0x34] sm:$0xf]
        %v880 = vld [vmem:[%s2 + $0x38] sm:$0xf]
        %v881 = vld [vmem:[%s2 + $0x3c] sm:$0xf]
        %v882 = vld [vmem:[%s2 + $0x40] sm:$0xf]
        %v883 = vld [vmem:[%s2 + $0x44] sm:$0xf]
        %v884 = vld [vmem:[%s2 + $0x48] sm:$0xf]
        %v885 = vld [vmem:[%s2 + $0x4c] sm:$0xf]
        %v886 = vld [vmem:[%s2 + $0x50] sm:$0xf]
        %v887 = vld [vmem:[%s2 + $0x54] sm:$0xf]
        %v888 = vld [vmem:[%s2 + $0x58] sm:$0xf]
        %v889 = vld [vmem:[%s2 + $0x5c] sm:$0xf]
        %v890 = vld [vmem:[%s2 + $0x60] sm:$0xf]
        %v891 = vld [vmem:[%s2 + $0x64] sm:$0xf]
        %v892 = vld [vmem:[%s2 + $0x68] sm:$0xf]
        %v893 = vld [vmem:[%s2 + $0x6c] sm:$0xf]
        %v894 = vld [vmem:[%s2 + $0x70] sm:$0xf]
        %v895 = vld [vmem:[%s2 + $0x74] sm:$0xf]
        %v896 = vld [vmem:[%s2 + $0x78] sm:$0xf]
        %v897 = vld [vmem:[%s2 + $0x7c] sm:$0xf]
        %v898 = vld [vmem:[%s2 + $0x80] sm:$0xf]
        %v899 = vld [vmem:[%s2 + $0x84] sm:$0xf]
        %v900 = vld [vmem:[%s2 + $0x88] sm:$0xf]
        %v901 = vld [vmem:[%s2 + $0x8c] sm:$0xf]
        %v938 = vunpack.c.l.b16 %v866
        %v939 = vunpack.c.l.b16 %v867
        %v940 = vunpack.c.l.b16 %v868
        %v941 = vunpack.c.l.b16 %v869
        %v942 = vunpack.c.l.b16 %v870
        %v943 = vunpack.c.l.b16 %v871
        %v944 = vunpack.c.l.b16 %v872
        %v945 = vunpack.c.l.b16 %v873
        %v946 = vunpack.c.l.b16 %v874
        %v947 = vunpack.c.l.b16 %v875
        %v948 = vunpack.c.l.b16 %v876
        %v949 = vunpack.c.l.b16 %v877
        %v950 = vunpack.c.l.b16 %v878
        %v951 = vunpack.c.l.b16 %v879
        %v952 = vunpack.c.l.b16 %v880
        %v953 = vunpack.c.l.b16 %v881
        %v954 = vunpack.c.l.b16 %v882
        %v955 = vunpack.c.l.b16 %v883
        %v956 = vunpack.c.l.b16 %v884
        %v957 = vunpack.c.l.b16 %v885
        %v958 = vunpack.c.l.b16 %v886
        %v959 = vunpack.c.l.b16 %v887
        %v960 = vunpack.c.l.b16 %v888
        %v961 = vunpack.c.l.b16 %v889
        %v962 = vunpack.c.l.b16 %v890
        %v963 = vunpack.c.l.b16 %v891
        %v964 = vunpack.c.l.b16 %v892
        %v965 = vunpack.c.l.b16 %v893
        %v966 = vunpack.c.l.b16 %v894
        %v967 = vunpack.c.l.b16 %v895
        %v968 = vunpack.c.l.b16 %v896
        %v969 = vunpack.c.l.b16 %v897
        %v970 = vunpack.c.l.b16 %v898
        %v971 = vunpack.c.l.b16 %v899
        %v972 = vunpack.c.l.b16 %v900
        %v973 = vunpack.c.l.b16 %v901
        %v974 = vpack.c.b16 %v939, %v938
        %v975 = vpack.c.b16 %v941, %v940
        %v976 = vpack.c.b16 %v943, %v942
        %v977 = vpack.c.b16 %v945, %v944
        %v978 = vpack.c.b16 %v947, %v946
        %v979 = vpack.c.b16 %v949, %v948
        %v980 = vpack.c.b16 %v951, %v950
        %v981 = vpack.c.b16 %v953, %v952
        %v982 = vpack.c.b16 %v955, %v954
        %v983 = vpack.c.b16 %v957, %v956
        %v984 = vpack.c.b16 %v959, %v958
        %v985 = vpack.c.b16 %v961, %v960
        %v986 = vpack.c.b16 %v963, %v962
        %v987 = vpack.c.b16 %v965, %v964
        %v988 = vpack.c.b16 %v967, %v966
        %v989 = vpack.c.b16 %v969, %v968
        %v990 = vpack.c.b16 %v971, %v970
        %v991 = vpack.c.b16 %v973, %v972
        %v1011 = vsel %vm414, %v844, 0
        %v1014 = vsel %vm414, %v847, 0
        %v1017 = vsel %vm414, %v850, 0
        %v1020 = vsel %vm414, %v853, 0
        %v1023 = vsel %vm414, %v856, 0
        %v1026 = vsel %vm414, %v859, 0
        %v1029 = vsel %vm414, %v862, 0
        %v1032 = vsel %vm414, %v865, 0
        %1034 = vmatprep.subr.bf16.mxu0 0
        %1035 = vmatpush1.bf16.msra.mxu0 %v974
        %1036 = vmatprep.subr.bf16.mxu0 0
        %1037 = vmatpush1.bf16.msra.mxu0 %v975
        %1038 = vmatprep.subr.bf16.mxu0 0
        %1039 = vmatpush1.bf16.msra.mxu0 %v976
        %1040 = vmatprep.subr.bf16.mxu0 0
        %1041 = vmatpush1.bf16.msra.mxu0 %v977
        %1042 = vmatprep.subr.bf16.mxu0 0
        %1043 = vmatpush1.bf16.msra.mxu0 %v978
        %1044 = vmatprep.subr.bf16.mxu0 0
        %1045 = vmatpush1.bf16.msra.mxu0 %v979
        %1046 = vmatprep.subr.bf16.mxu0 0
        %1047 = vmatpush1.bf16.msra.mxu0 %v980
        %1048 = vmatprep.subr.bf16.mxu0 0
        %1049 = vmatpush1.bf16.msra.mxu0 %v981
        %1050 = vmatprep.subr.bf16.mxu0 0
        %1051 = vmatpush1.bf16.msra.mxu0 %v982
        %1052 = vmatprep.subr.bf16.mxu0 0
        %1053 = vmatpush1.bf16.msra.mxu0 %v983
        %1054 = vmatprep.subr.bf16.mxu0 0
        %1055 = vmatpush1.bf16.msra.mxu0 %v984
        %1056 = vmatprep.subr.bf16.mxu0 0
        %1057 = vmatpush1.bf16.msra.mxu0 %v985
        %1058 = vmatprep.subr.bf16.mxu0 0
        %1059 = vmatpush1.bf16.msra.mxu0 %v986
        %1060 = vmatprep.subr.bf16.mxu0 0
        %1061 = vmatpush1.bf16.msra.mxu0 %v987
        %1062 = vmatprep.subr.bf16.mxu0 0
        %1063 = vmatpush1.bf16.msra.mxu0 %v988
        %1064 = vmatprep.subr.bf16.mxu0 0
        %1065 = vmatpush1.bf16.msra.mxu0 %v989
        %1066 = vmatprep.mubr.bf16.mxu0 %v843
        %1067 = vmatmul.mubr.bf16.gmra.mrb[0].mxu0 %v842
        %v1068 = vpop.f32.mrb[0].mxu0
        %v1069 = vadd.f32 0.0, %v1068
        %v1070 = vpop.f32.mrb[0].mxu0
        %v1071 = vpop.f32.mrb[0].mxu0
        %v1072 = vadd.f32 0.0, %v1071
        %v1073 = vpop.f32.mrb[0].mxu0
        %1074 = vmatprep.mubr.bf16.mxu0 %v846
        %1075 = vmatmul.mubr.bf16.gmra.mrb[0].mxu0 %v845
        %v1076 = vpop.f32.mrb[0].mxu0
        %v1077 = vadd.f32 0.0, %v1076
        %v1078 = vpop.f32.mrb[0].mxu0
        %v1079 = vpop.f32.mrb[0].mxu0
        %v1080 = vadd.f32 0.0, %v1079
        %v1081 = vpop.f32.mrb[0].mxu0
        %1082 = vmatprep.mubr.bf16.mxu0 %v849
        %1083 = vmatmul.mubr.bf16.gmra.mrb[0].mxu0 %v848
        %v1084 = vpop.f32.mrb[0].mxu0
        %v1085 = vadd.f32 0.0, %v1084
        %v1086 = vpop.f32.mrb[0].mxu0
        %v1087 = vpop.f32.mrb[0].mxu0
        %v1088 = vadd.f32 0.0, %v1087
        %v1089 = vpop.f32.mrb[0].mxu0
        %1090 = vmatprep.mubr.bf16.mxu0 %v852
        %1091 = vmatmul.mubr.bf16.gmra.mrb[0].mxu0 %v851
        %v1092 = vpop.f32.mrb[0].mxu0
        %v1093 = vadd.f32 0.0, %v1092
        %v1094 = vpop.f32.mrb[0].mxu0
        %v1095 = vpop.f32.mrb[0].mxu0
        %v1096 = vadd.f32 0.0, %v1095
        %v1097 = vpop.f32.mrb[0].mxu0
        %1098 = vmatprep.mubr.bf16.mxu0 %v855
        %1099 = vmatmul.mubr.bf16.gmra.mrb[0].mxu0 %v854
        %v1100 = vpop.f32.mrb[0].mxu0
        %v1101 = vadd.f32 0.0, %v1100
        %v1102 = vpop.f32.mrb[0].mxu0
        %v1103 = vpop.f32.mrb[0].mxu0
        %v1104 = vadd.f32 0.0, %v1103
        %v1105 = vpop.f32.mrb[0].mxu0
        %1106 = vmatprep.mubr.bf16.mxu0 %v858
        %1107 = vmatmul.mubr.bf16.gmra.mrb[0].mxu0 %v857
        %v1108 = vpop.f32.mrb[0].mxu0
        %v1109 = vadd.f32 0.0, %v1108
        %v1110 = vpop.f32.mrb[0].mxu0
        %v1111 = vpop.f32.mrb[0].mxu0
        %v1112 = vadd.f32 0.0, %v1111
        %v1113 = vpop.f32.mrb[0].mxu0
        %1114 = vmatprep.mubr.bf16.mxu0 %v861
        %1115 = vmatmul.mubr.bf16.gmra.mrb[0].mxu0 %v860
        %v1116 = vpop.f32.mrb[0].mxu0
        %v1117 = vadd.f32 0.0, %v1116
        %v1118 = vpop.f32.mrb[0].mxu0
        %v1119 = vpop.f32.mrb[0].mxu0
        %v1120 = vadd.f32 0.0, %v1119
        %v1121 = vpop.f32.mrb[0].mxu0
        %1122 = vmatprep.mubr.bf16.mxu0 %v864
        %1123 = vmatmul.mubr.bf16.gmra.mrb[0].mxu0 %v863
        %v1124 = vpop.f32.mrb[0].mxu0
        %v1125 = vadd.f32 0.0, %v1124
        %v1126 = vpop.f32.mrb[0].mxu0
        %v1127 = vpop.f32.mrb[0].mxu0
        %v1128 = vadd.f32 0.0, %v1127
        %v1129 = vpop.f32.mrb[0].mxu0
        %1130 = vdwg.mxu0
        %1131 = vmatprep.subr.bf16.mxu0 0
        %1132 = vmatpush1.bf16.msra.mxu0 %v990
        %1133 = vmatprep.subr.bf16.mxu0 0
        %1134 = vmatpush1.bf16.msra.mxu0 %v991
        %1135 = vmatprep.subr.bf16.mxu0 0
        %1136 = vmatpush1.bf16.msra.mxu0 0
        %1137 = vmatprep.subr.bf16.mxu0 0
        %1138 = vmatpush1.bf16.msra.mxu0 0
        %1139 = vmatprep.subr.bf16.mxu0 0
        %1140 = vmatpush1.bf16.msra.mxu0 0
        %1141 = vmatprep.subr.bf16.mxu0 0
        %1142 = vmatpush1.bf16.msra.mxu0 0
        %1143 = vmatprep.subr.bf16.mxu0 0
        %1144 = vmatpush1.bf16.msra.mxu0 0
        %1145 = vmatprep.subr.bf16.mxu0 0
        %1146 = vmatpush1.bf16.msra.mxu0 0
        %1147 = vmatprep.subr.bf16.mxu0 0
        %1148 = vmatpush1.bf16.msra.mxu0 0
        %1149 = vmatprep.subr.bf16.mxu0 0
        %1150 = vmatpush1.bf16.msra.mxu0 0
        %1151 = vmatprep.subr.bf16.mxu0 0
        %1152 = vmatpush1.bf16.msra.mxu0 0
        %1153 = vmatprep.subr.bf16.mxu0 0
        %1154 = vmatpush1.bf16.msra.mxu0 0
        %1155 = vmatprep.subr.bf16.mxu0 0
        %1156 = vmatpush1.bf16.msra.mxu0 0
        %1157 = vmatprep.subr.bf16.mxu0 0
        %1158 = vmatpush1.bf16.msra.mxu0 0
        %1159 = vmatprep.subr.bf16.mxu0 0
        %1160 = vmatpush1.bf16.msra.mxu0 0
        %1161 = vmatprep.subr.bf16.mxu0 0
        %1162 = vmatpush1.bf16.msra.mxu0 0
        %1163 = vmatprep.mubr.bf16.mxu0 0
        %1164 = vmatmul.mubr.bf16.gmra.mrb[0].mxu0 %v1011
        %v1165 = vpop.f32.mrb[0].mxu0
        %v1166 = vadd.f32 %v1069, %v1165
        %v1167 = vpop.f32.mrb[0].mxu0
        %v1168 = vpop.f32.mrb[0].mxu0
        %v1169 = vadd.f32 %v1072, %v1168
        %v1170 = vpop.f32.mrb[0].mxu0
        %1171 = vmatprep.mubr.bf16.mxu0 0
        %1172 = vmatmul.mubr.bf16.gmra.mrb[0].mxu0 %v1014
        %v1173 = vpop.f32.mrb[0].mxu0
        %v1174 = vadd.f32 %v1077, %v1173
        %v1175 = vpop.f32.mrb[0].mxu0
        %v1176 = vpop.f32.mrb[0].mxu0
        %v1177 = vadd.f32 %v1080, %v1176
        %v1178 = vpop.f32.mrb[0].mxu0
        %1179 = vmatprep.mubr.bf16.mxu0 0
        %1180 = vmatmul.mubr.bf16.gmra.mrb[0].mxu0 %v1017
        %v1181 = vpop.f32.mrb[0].mxu0
        %v1182 = vadd.f32 %v1085, %v1181
        %v1183 = vpop.f32.mrb[0].mxu0
        %v1184 = vpop.f32.mrb[0].mxu0
        %v1185 = vadd.f32 %v1088, %v1184
        %v1186 = vpop.f32.mrb[0].mxu0
        %1187 = vmatprep.mubr.bf16.mxu0 0
        %1188 = vmatmul.mubr.bf16.gmra.mrb[0].mxu0 %v1020
        %v1189 = vpop.f32.mrb[0].mxu0
        %v1190 = vadd.f32 %v1093, %v1189
        %v1191 = vpop.f32.mrb[0].mxu0
        %v1192 = vpop.f32.mrb[0].mxu0
        %v1193 = vadd.f32 %v1096, %v1192
        %v1194 = vpop.f32.mrb[0].mxu0
        %1195 = vmatprep.mubr.bf16.mxu0 0
        %1196 = vmatmul.mubr.bf16.gmra.mrb[0].mxu0 %v1023
        %v1197 = vpop.f32.mrb[0].mxu0
        %v1198 = vadd.f32 %v1101, %v1197
        %v1199 = vpop.f32.mrb[0].mxu0
        %v1200 = vpop.f32.mrb[0].mxu0
        %v1201 = vadd.f32 %v1104, %v1200
        %v1202 = vpop.f32.mrb[0].mxu0
        %1203 = vmatprep.mubr.bf16.mxu0 0
        %1204 = vmatmul.mubr.bf16.gmra.mrb[0].mxu0 %v1026
        %v1205 = vpop.f32.mrb[0].mxu0
        %v1206 = vadd.f32 %v1109, %v1205
        %v1207 = vpop.f32.mrb[0].mxu0
        %v1208 = vpop.f32.mrb[0].mxu0
        %v1209 = vadd.f32 %v1112, %v1208
        %v1210 = vpop.f32.mrb[0].mxu0
        %1211 = vmatprep.mubr.bf16.mxu0 0
        %1212 = vmatmul.mubr.bf16.gmra.mrb[0].mxu0 %v1029
        %v1213 = vpop.f32.mrb[0].mxu0
        %v1214 = vadd.f32 %v1117, %v1213
        %v1215 = vpop.f32.mrb[0].mxu0
        %v1216 = vpop.f32.mrb[0].mxu0
        %v1217 = vadd.f32 %v1120, %v1216
        %v1218 = vpop.f32.mrb[0].mxu0
        %1219 = vmatprep.mubr.bf16.mxu0 0
        %1220 = vmatmul.mubr.bf16.gmra.mrb[0].mxu0 %v1032
        %v1221 = vpop.f32.mrb[0].mxu0
        %v1222 = vadd.f32 %v1125, %v1221
        %v1223 = vpop.f32.mrb[0].mxu0
        %v1224 = vpop.f32.mrb[0].mxu0
        %v1225 = vadd.f32 %v1128, %v1224
        %v1226 = vpop.f32.mrb[0].mxu0
        %1227 = vdwg.mxu0
        %v1228 = vld [vmem:[%s3] sm:$0x1]
        %v1230 = vlaneseq
        %v1231 = vshrl.u32 %v1230, 7
        %v1232 = vsub.s32 0, %v1231
        %v1233 = vrot.slane %v1228, %v1232
        %v1235 = vmul.f32 %v1166, %v1233
        %v1236 = vmul.f32 %v1169, %v1233
        %v1237 = vmul.f32 %v1174, %v1233
        %v1238 = vmul.f32 %v1177, %v1233
        %v1239 = vmul.f32 %v1182, %v1233
        %v1240 = vmul.f32 %v1185, %v1233
        %v1241 = vmul.f32 %v1190, %v1233
        %v1242 = vmul.f32 %v1193, %v1233
        %v1243 = vmul.f32 %v1198, %v1233
        %v1244 = vmul.f32 %v1201, %v1233
        %v1245 = vmul.f32 %v1206, %v1233
        %v1246 = vmul.f32 %v1209, %v1233
        %v1247 = vmul.f32 %v1214, %v1233
        %v1248 = vmul.f32 %v1217, %v1233
        %v1249 = vmul.f32 %v1222, %v1233
        %v1250 = vmul.f32 %v1225, %v1233
        %v1251 = vld [vmem:[%s4] sm:$0x1]
        %v1253 = vlaneseq
        %v1254 = vshrl.u32 %v1253, 7
        %v1255 = vsub.s32 0, %v1254
        %v1256 = vrot.slane %v1251, %v1255
        %v1258 = vadd.f32 %v1235, %v1256
        %v1259 = vadd.f32 %v1236, %v1256
        %v1260 = vadd.f32 %v1237, %v1256
        %v1261 = vadd.f32 %v1238, %v1256
        %v1262 = vadd.f32 %v1239, %v1256
        %v1263 = vadd.f32 %v1240, %v1256
        %v1264 = vadd.f32 %v1241, %v1256
        %v1265 = vadd.f32 %v1242, %v1256
        %v1266 = vadd.f32 %v1243, %v1256
        %v1267 = vadd.f32 %v1244, %v1256
        %v1268 = vadd.f32 %v1245, %v1256
        %v1269 = vadd.f32 %v1246, %v1256
        %v1270 = vadd.f32 %v1247, %v1256
        %v1271 = vadd.f32 %v1248, %v1256
        %v1272 = vadd.f32 %v1249, %v1256
        %v1273 = vadd.f32 %v1250, %v1256
        %v1274 = vmax.f32 %v1258, 0.0
        %v1275 = vmax.f32 %v1259, 0.0
        %v1276 = vmax.f32 %v1260, 0.0
        %v1277 = vmax.f32 %v1261, 0.0
        %v1278 = vmax.f32 %v1262, 0.0
        %v1279 = vmax.f32 %v1263, 0.0
        %v1280 = vmax.f32 %v1264, 0.0
        %v1281 = vmax.f32 %v1265, 0.0
        %v1282 = vmax.f32 %v1266, 0.0
        %v1283 = vmax.f32 %v1267, 0.0
        %v1284 = vmax.f32 %v1268, 0.0
        %v1285 = vmax.f32 %v1269, 0.0
        %v1286 = vmax.f32 %v1270, 0.0
        %v1287 = vmax.f32 %v1271, 0.0
        %v1288 = vmax.f32 %v1272, 0.0
        %v1289 = vmax.f32 %v1273, 0.0
        %v1290 = vpack.c.bf16 %v1275, %v1274
        %v1291 = vpack.c.bf16 %v1277, %v1276
        %v1292 = vpack.c.bf16 %v1279, %v1278
        %v1293 = vpack.c.bf16 %v1281, %v1280
        %v1294 = vpack.c.bf16 %v1283, %v1282
        %v1295 = vpack.c.bf16 %v1285, %v1284
        %v1296 = vpack.c.bf16 %v1287, %v1286
        %v1297 = vpack.c.bf16 %v1289, %v1288
        %v1306 = vunpack.c.l.b16 %v1290
        %v1307 = vunpack.c.h.b16 %v1290
        %v1308 = vunpack.c.l.b16 %v1291
        %v1309 = vunpack.c.h.b16 %v1291
        %v1310 = vunpack.c.l.b16 %v1292
        %v1311 = vunpack.c.h.b16 %v1292
        %v1312 = vunpack.c.l.b16 %v1293
        %v1313 = vunpack.c.h.b16 %v1293
        %v1314 = vunpack.c.l.b16 %v1294
        %v1315 = vunpack.c.h.b16 %v1294
        %v1316 = vunpack.c.l.b16 %v1295
        %v1317 = vunpack.c.h.b16 %v1295
        %v1318 = vunpack.c.l.b16 %v1296
        %v1319 = vunpack.c.h.b16 %v1296
        %v1320 = vunpack.c.l.b16 %v1297
        %v1321 = vunpack.c.h.b16 %v1297
        %v1322 = vpack.c.b16 %v1306, %v1306
        %v1323 = vpack.c.b16 %v1307, %v1307
        %v1324 = vpack.c.b16 %v1308, %v1308
        %v1325 = vpack.c.b16 %v1309, %v1309
        %v1326 = vpack.c.b16 %v1310, %v1310
        %v1327 = vpack.c.b16 %v1311, %v1311
        %v1328 = vpack.c.b16 %v1312, %v1312
        %v1329 = vpack.c.b16 %v1313, %v1313
        %v1330 = vpack.c.b16 %v1314, %v1314
        %v1331 = vpack.c.b16 %v1315, %v1315
        %v1332 = vpack.c.b16 %v1316, %v1316
        %v1333 = vpack.c.b16 %v1317, %v1317
        %v1334 = vpack.c.b16 %v1318, %v1318
        %v1335 = vpack.c.b16 %v1319, %v1319
        %v1336 = vpack.c.b16 %v1320, %v1320
        %v1337 = vpack.c.b16 %v1321, %v1321
        %1354 = vst [vmem:[%s297] sm:$0xf] %v1322
        %1355 = vst [vmem:[%s297 + $0x4] sm:$0xf] %v1323
        %1356 = vst [vmem:[%s297 + $0x8] sm:$0xf] %v1324
        %1357 = vst [vmem:[%s297 + $0xc] sm:$0xf] %v1325
        %1358 = vst [vmem:[%s297 + $0x10] sm:$0xf] %v1326
        %1359 = vst [vmem:[%s297 + $0x14] sm:$0xf] %v1327
        %1360 = vst [vmem:[%s297 + $0x18] sm:$0xf] %v1328
        %1361 = vst [vmem:[%s297 + $0x1c] sm:$0xf] %v1329
        %1362 = vst [vmem:[%s297 + $0x20] sm:$0xf] %v1330
        %1363 = vst [vmem:[%s297 + $0x24] sm:$0xf] %v1331
        %1364 = vst [vmem:[%s297 + $0x28] sm:$0xf] %v1332
        %1365 = vst [vmem:[%s297 + $0x2c] sm:$0xf] %v1333
        %1366 = vst [vmem:[%s297 + $0x30] sm:$0xf] %v1334
        %1367 = vst [vmem:[%s297 + $0x34] sm:$0xf] %v1335
        %1368 = vst [vmem:[%s297 + $0x38] sm:$0xf] %v1336
        %1369 = vst [vmem:[%s297 + $0x3c] sm:$0xf] %v1337
        %s1370 = sand.u32 %s164, 1
        %s1371 = scalar_lea.sflag [#allocation4], %s1370
        %s1372 = sand.u32 %s164, 1
        %s1373 = smul.addr %s1372, 64
        %s1374 = scalar_lea.vmem [#allocation3], %s1373
        // Predicated region
        $region41: #{double_conv2_forward_nhwc.1} parent=39 // pred_check
          %p1375 = pneg %p174
        $region42: #{double_conv2_forward_nhwc.1} parent=39 // pred_check_branch
          %1377 = sbr.rel (%p1375) target = $region44
        $region43: #{double_conv2_forward_nhwc.1} parent=39 // pred_region
          %s1378 = smul.u32 8, %s24
          %s1380 = ssub.s32 1024, 1024
          %1381 = vsyncadd %s1371, %s1380
          %s1382 = smul.addr %s1378, 2
          %s1383 = smul.addr %s23, 32
          %s1384 = sadd.s32 %s1382, %s1383
          %s1385 = smul.addr %s1384, 64
          %s1386 = scalar_lea.hbm %s5, %s1385
          %s1387 = sshll.u32 %s1374, 4
          %s1388 = int_to_ptr.vmem [resolvable:$true] %s1387
          %1393 = dma.vmem_to_hbm [thread:$0]  %s1388, 1024, %s1386, %s1371, 64, 64, 4
        $region44: #{double_conv2_forward_nhwc.1} parent=39 // pred_fallthru
          _
      $region40: #{double_conv2_forward_nhwc.1} parent=5 // pred_fallthru
        _
      %p1394 = scmp.le.s32.totalorder 2, %s14
      // Predicated region
      $region45: #{double_conv2_forward_nhwc.1} parent=5 // pred_check
        %p1395 = pneg %p1394
      $region46: #{double_conv2_forward_nhwc.1} parent=5 // pred_check_branch
        %1397 = sbr.rel (%p1395) target = $region48
      $region47: #{double_conv2_forward_nhwc.1} parent=5 // pred_region
        %s1398 = ssub.s32 %s14, 2
        // Predicated region
        $region49: #{double_conv2_forward_nhwc.1} parent=47 // pred_check
          %p1399 = pneg %p180
        $region50: #{double_conv2_forward_nhwc.1} parent=47 // pred_check_branch
          %1401 = sbr.rel (%p1399) target = $region52
        $region51: #{double_conv2_forward_nhwc.1} parent=47 // pred_region
          %s1402 = sand.u32 %s165, 1
          %s1403 = scalar_lea.sflag [#allocation4], %s1402
          %s1404 = sand.u32 %s165, 1
          %s1405 = smul.addr %s1404, 64
          %s1406 = scalar_lea.vmem [#allocation3], %s1405
          %1407 = dma.done %s1403, 1024
        $region52: #{double_conv2_forward_nhwc.1} parent=47 // pred_fallthru
          _
      $region48: #{double_conv2_forward_nhwc.1} parent=5 // pred_fallthru
        _
    $region6: #{double_conv2_forward_nhwc.1} parent=1 // loop_footer
      %s18 = sadd.s32 1, %s14
    $region7: #{double_conv2_forward_nhwc.1} parent=1 // loop_footer_branch
      %13 = sbr.rel target = $region3
    $region8: #{double_conv2_forward_nhwc.1} parent=1 // loop_exit
      _
    %1408 = vsyncpa [#allocation4], 1
    %s1409 = scalar_lea.sflag [#allocation4], 1
    %1410 = vsyncpa %s1409, 1

</llo_original>
